<compile_context>
chip_gen: v7x
topology: tpu7x:2x2x1
jax: 0.10.0
libtpu: 0.0.40
codegen_flags: <defaults>
</compile_context>

<pallas_src>
import math

import jax
import jax.numpy as jnp
from jax.experimental import pallas as pl
from jax.experimental.pallas import tpu as pltpu


def _round_up(x, m):
    return ((x + m - 1) // m) * m


def _cdiv(a, b):
    return -(-a // b)


def _vmem_capacity_bytes():
    try:
        cap = getattr(pltpu.get_tpu_info(), "vmem_capacity_bytes", None)
        if cap:
            return int(cap)
    except Exception:
        pass
    return 64 << 20          # conservative fallback: v7x per-TensorCore VMEM


def _choose_row_tiling(m, tm_req):
    """Balanced row tiles: tm % 8 == 0, last tile not mostly padding, and
    >= 2 grid steps when there is enough work (v7x megacore sharding)."""
    tm_req = max(8, _round_up(int(tm_req), 8))
    n_tiles = max(1, _cdiv(m, tm_req))
    if n_tiles < 2 and m >= 16:
        n_tiles = 2
    tm = _round_up(_cdiv(m, n_tiles), 8)
    n_tiles = max(1, _cdiv(m, tm))
    return tm, n_tiles, tm * n_tiles


# ----------------------------------------------------------------------------
# Fused MLP kernel:
#   h = relu(sum_p x_p @ W0[rows_p] + b0);  for l>=1: h = relu(h @ W_l + b_l)
# All weights stay resident in VMEM; h never round-trips HBM.
# ----------------------------------------------------------------------------
def _make_mlp_kernel(piece_widths, num_layers):
    n_pieces = len(piece_widths)

    def kernel(*refs):
        o_ref = refs[-1]
        piece_refs = refs[:n_pieces]
        wb = refs[n_pieces:-1]

        # Layer 0: concat(x_pieces) @ W0 == sum_p x_p @ W0[rows_p].
        acc = None
        for p in range(n_pieces):
            xp = piece_refs[p][...]
            wp = wb[p][...]
            if piece_widths[p] == 1:
                # (tm,1)*(1,N) broadcast on the VPU -- avoids a degenerate K=1 matmul.
                contrib = xp.astype(jnp.float32) * wp.astype(jnp.float32)
            else:
                contrib = jnp.dot(xp, wp, preferred_element_type=jnp.float32)
            acc = contrib if acc is None else acc + contrib
        h = jnp.maximum(acc + wb[n_pieces][...], 0.0)

        # Layers 1 .. L-1 (ReLU after every layer, matching the PyTorch module).
        base = n_pieces + 1
        for l in range(1, num_layers):
            w_ref = wb[base + 2 * (l - 1)]
            b_ref = wb[base + 2 * (l - 1) + 1]
            h = jnp.dot(h.astype(w_ref.dtype), w_ref[...],
                        preferred_element_type=jnp.float32)
            h = jnp.maximum(h + b_ref[...], 0.0)

        o_ref[...] = h.astype(o_ref.dtype)

    return kernel


# ----------------------------------------------------------------------------
# Pair_Shop_MLP forward.
# ----------------------------------------------------------------------------
def pair_shop_mlp_forward(params, shops_embedding, distances_embedding,
                          ratings, comments, prices_embedding, group,
                          *, tm=512, use_bf16=False):
    B, S = ratings.shape
    M = B * S
    num_layers = len(params)
    n_out = int(params[-1][0].shape[1])
    compute_dtype = jnp.bfloat16 if use_bf16 else jnp.float32

    # The six concat pieces, flattened to (M, K_p) -- pure metadata reshapes.
    pieces = [
        shops_embedding.reshape(M, -1),
        distances_embedding.reshape(M, -1),
        ratings.reshape(M, 1),
        comments.reshape(M, 1),
        prices_embedding.reshape(M, -1),
        group.reshape(M, 1),
    ]
    piece_widths = [int(p.shape[1]) for p in pieces]
    d_in = sum(piece_widths)
    assert int(params[0][0].shape[0]) == d_in, "layer-0 fan-in must match concat width"

    # Row tiling (multiple of 8, balanced, >= 2 tiles when M allows).
    tm_eff, grid_m, m_pad = _choose_row_tiling(M, tm)
    if m_pad > M:
        pieces = [jnp.pad(p, ((0, m_pad - M), (0, 0))) for p in pieces]
    pieces = [p.astype(compute_dtype) for p in pieces]

    # Pad hidden-layer lane widths to multiples of 128 (padded lanes stay 0
    # through zero-padded bias + ReLU); the final layer keeps its exact width.
    padded = []
    prev_width = d_in
    for l, (w, b) in enumerate(params):
        K, N = int(w.shape[0]), int(w.shape[1])
        n_pad = N if l == num_layers - 1 else _round_up(N, 128)
        k_pad = K if l == 0 else prev_width
        if k_pad > K or n_pad > N:
            w = jnp.pad(w, ((0, k_pad - K), (0, n_pad - N)))
        if n_pad > N:
            b = jnp.pad(b, ((0, 0), (0, n_pad - N)))
        padded.append((w.astype(compute_dtype), b.astype(jnp.float32)))
        prev_width = n_pad

    # Split layer-0 weights into one row block per input piece.
    w0, b0 = padded[0]
    w0_blocks, off = [], 0
    for kw in piece_widths:
        w0_blocks.append(w0[off:off + kw, :])
        off += kw

    flat_wb = list(w0_blocks) + [b0]
    for (wl, bl) in padded[1:]:
        flat_wb.extend([wl, bl])

    # BlockSpecs: pieces row-tiled; weights/biases whole-array blocks with a
    # constant index_map and a single (non-double) buffer.
    in_specs = [pl.BlockSpec((tm_eff, int(p.shape[1])), lambda i: (i, 0))
                for p in pieces]
    in_specs += [pl.BlockSpec(a.shape, lambda i: (0, 0),
                              pipeline_mode=pl.Buffered(1))
                 for a in flat_wb]
    out_spec = pl.BlockSpec((tm_eff, n_out), lambda i: (i, 0))

    # VMEM budget: resident weights + double-buffered row tiles + live
    # intermediates, capped at ~3/4 of the per-core capacity.
    act_itemsize = 2 if use_bf16 else 4
    weight_bytes = sum(int(a.size) * a.dtype.itemsize for a in flat_wb)
    io_tile_bytes = (sum(piece_widths) * act_itemsize + n_out * 4) * tm_eff
    max_width = max([d_in] + [int(bp.shape[1]) for (_, bp) in padded])
    interm_bytes = 3 * tm_eff * max_width * 4
    cap = _vmem_capacity_bytes()
    if weight_bytes > (cap * 3) // 5:
        # TODO(synk): add a K/N-tiled fallback grid (extra "arbitrary" axis +
        # f32 accumulator scratch) for configs whose weights do not fit VMEM.
        raise NotImplementedError("Pair_Shop_MLP weights do not fit the "
                                  "resident-in-VMEM fused-MLP fast path")
    need = weight_bytes + 2 * io_tile_bytes + interm_bytes + (2 << 20)
    vmem_limit = int(min((cap * 3) // 4, max(need, 16 << 20)))

    out = pl.pallas_call(
        _make_mlp_kernel(tuple(piece_widths), num_layers),
        out_shape=jax.ShapeDtypeStruct((m_pad, n_out), jnp.float32),
        grid_spec=pltpu.PrefetchScalarGridSpec(
            num_scalar_prefetch=0,
            grid=(grid_m,),
            in_specs=in_specs,
            out_specs=out_spec,
        ),
        compiler_params=pltpu.CompilerParams(
            dimension_semantics=("parallel",),
            vmem_limit_bytes=vmem_limit,
        ),
    )(*pieces, *flat_wb)

    if m_pad > M:
        out = out[:M]              # cheap leading-dim row slice only
    return out.reshape(B, S, n_out)


def init_params(layers, key):
    """PyTorch-style nn.Linear init: U(-1/sqrt(fan_in), 1/sqrt(fan_in))."""
    params = []
    for in_size, out_size in zip(layers[:-1], layers[1:]):
        key, kw, kb = jax.random.split(key, 3)
        bound = 1.0 / math.sqrt(in_size)
        w = jax.random.uniform(kw, (in_size, out_size), jnp.float32,
                               minval=-bound, maxval=bound)
        b = jax.random.uniform(kb, (1, out_size), jnp.float32,
                               minval=-bound, maxval=bound)
        params.append((w, b))
    return params


# ----------------------------------------------------------------------------
# Pure-JAX reference for correctness checking (full-precision f32 dots).
# ----------------------------------------------------------------------------
def reference_forward(params, shops_embedding, distances_embedding,
                      ratings, comments, prices_embedding, group):
    B, S = ratings.shape
    vector = jnp.concatenate(
        [shops_embedding, distances_embedding,
         ratings.reshape(B, S, 1), comments.reshape(B, S, 1),
         prices_embedding, group.reshape(B, S, 1)], axis=-1)
    for (w, b) in params:
        vector = jnp.maximum(
            jnp.dot(vector, w, precision=jax.lax.Precision.HIGHEST) + b[0], 0.0)
    return vector


if __name__ == "__main__":
    key = jax.random.PRNGKey(0)

    # Small synthetic config: concat feature dim = 16 + 8 + 1 + 1 + 5 + 1 = 32
    B, S = 2, 8
    E_shop, E_dist, E_price = 16, 8, 5
    shop_mlp_layers = [32, 64, 32]

    k1, k2, k3, k4, k5, k6, kp = jax.random.split(key, 7)
    shops_embedding = jax.random.normal(k1, (B, S, E_shop), jnp.float32)
    distances_embedding = jax.random.normal(k2, (B, S, E_dist), jnp.float32)
    ratings = jax.random.normal(k3, (B, S), jnp.float32)
    comments = jax.random.normal(k4, (B, S), jnp.float32)
    prices_embedding = jax.random.normal(k5, (B, S, E_price), jnp.float32)
    group = jax.random.normal(k6, (B, S), jnp.float32)

    params = init_params(shop_mlp_layers, kp)

    out = pair_shop_mlp_forward(params, shops_embedding, distances_embedding,
                                ratings, comments, prices_embedding, group)
    out = jax.block_until_ready(out)

    ref = reference_forward(params, shops_embedding, distances_embedding,
                            ratings, comments, prices_embedding, group)
    assert out.shape == (B, S, shop_mlp_layers[-1])
    assert jnp.allclose(out, ref, atol=1e-5, rtol=1e-5)

    print("KERNEL_OK")
</pallas_src>

<mosaic_0001>
module attributes {stable_mosaic.version = 11 : i64} {
  func.func @kernel(%arg0: i32, %arg1: memref<8x16xf32, #tpu.memory_space<vmem>>, %arg2: memref<8x8xf32, #tpu.memory_space<vmem>>, %arg3: memref<8x1xf32, #tpu.memory_space<vmem>>, %arg4: memref<8x1xf32, #tpu.memory_space<vmem>>, %arg5: memref<8x5xf32, #tpu.memory_space<vmem>>, %arg6: memref<8x1xf32, #tpu.memory_space<vmem>>, %arg7: memref<16x128xf32, #tpu.memory_space<vmem>>, %arg8: memref<8x128xf32, #tpu.memory_space<vmem>>, %arg9: memref<1x128xf32, #tpu.memory_space<vmem>>, %arg10: memref<1x128xf32, #tpu.memory_space<vmem>>, %arg11: memref<5x128xf32, #tpu.memory_space<vmem>>, %arg12: memref<1x128xf32, #tpu.memory_space<vmem>>, %arg13: memref<1x128xf32, #tpu.memory_space<vmem>>, %arg14: memref<128x32xf32, #tpu.memory_space<vmem>>, %arg15: memref<1x32xf32, #tpu.memory_space<vmem>>, %arg16: memref<8x32xf32, #tpu.memory_space<vmem>>) attributes {dimension_semantics = [#tpu.dimension_semantics<parallel>], iteration_bounds = array<i64: 2>, scalar_prefetch = 0 : i64, scratch_operands = 0 : i64, tpu.core_type = #tpu.core_type<tc>, window_params = [{transform_indices = @transform_0, window_bounds = array<i64: 8, 16>}, {transform_indices = @transform_1, window_bounds = array<i64: 8, 8>}, {transform_indices = @transform_2, window_bounds = array<i64: 8, 1>}, {transform_indices = @transform_3, window_bounds = array<i64: 8, 1>}, {transform_indices = @transform_4, window_bounds = array<i64: 8, 5>}, {transform_indices = @transform_5, window_bounds = array<i64: 8, 1>}, {pipeline_mode = #tpu.pipeline_mode<synchronous>, transform_indices = @transform_6, window_bounds = array<i64: 16, 128>}, {pipeline_mode = #tpu.pipeline_mode<synchronous>, transform_indices = @transform_7, window_bounds = array<i64: 8, 128>}, {pipeline_mode = #tpu.pipeline_mode<synchronous>, transform_indices = @transform_8, window_bounds = array<i64: 1, 128>}, {pipeline_mode = #tpu.pipeline_mode<synchronous>, transform_indices = @transform_9, window_bounds = array<i64: 1, 128>}, {pipeline_mode = #tpu.pipeline_mode<synchronous>, transform_indices = @transform_10, window_bounds = array<i64: 5, 128>}, {pipeline_mode = #tpu.pipeline_mode<synchronous>, transform_indices = @transform_11, window_bounds = array<i64: 1, 128>}, {pipeline_mode = #tpu.pipeline_mode<synchronous>, transform_indices = @transform_12, window_bounds = array<i64: 1, 128>}, {pipeline_mode = #tpu.pipeline_mode<synchronous>, transform_indices = @transform_13, window_bounds = array<i64: 128, 32>}, {pipeline_mode = #tpu.pipeline_mode<synchronous>, transform_indices = @transform_14, window_bounds = array<i64: 1, 32>}, {transform_indices = @transform_15, window_bounds = array<i64: 8, 32>}]} {
    %c0 = arith.constant 0 : index
    %c0_0 = arith.constant 0 : index
    %0 = vector.load %arg1[%c0, %c0_0] : memref<8x16xf32, #tpu.memory_space<vmem>>, vector<8x16xf32>
    %c0_1 = arith.constant 0 : index
    %c0_2 = arith.constant 0 : index
    %1 = vector.load %arg7[%c0_1, %c0_2] : memref<16x128xf32, #tpu.memory_space<vmem>>, vector<16x128xf32>
    %cst = arith.constant dense<0.000000e+00> : vector<8x128xf32>
    %2 = tpu.matmul %0, %1, %cst {dimension_numbers = #tpu.dot_dimension_numbers<[1], [0], [0], [1], [0, 0, 1, 1], [], []>} : vector<8x16xf32>, vector<16x128xf32>, vector<8x128xf32> -> vector<8x128xf32>
    %c0_3 = arith.constant 0 : index
    %c0_4 = arith.constant 0 : index
    %3 = vector.load %arg2[%c0_3, %c0_4] : memref<8x8xf32, #tpu.memory_space<vmem>>, vector<8x8xf32>
    %c0_5 = arith.constant 0 : index
    %c0_6 = arith.constant 0 : index
    %4 = vector.load %arg8[%c0_5, %c0_6] : memref<8x128xf32, #tpu.memory_space<vmem>>, vector<8x128xf32>
    %cst_7 = arith.constant dense<0.000000e+00> : vector<8x128xf32>
    %5 = tpu.matmul %3, %4, %cst_7 {dimension_numbers = #tpu.dot_dimension_numbers<[1], [0], [0], [1], [0, 0, 1, 1], [], []>} : vector<8x8xf32>, vector<8x128xf32>, vector<8x128xf32> -> vector<8x128xf32>
    %6 = arith.addf %2, %5 : vector<8x128xf32>
    %c0_8 = arith.constant 0 : index
    %c0_9 = arith.constant 0 : index
    %7 = vector.load %arg3[%c0_8, %c0_9] : memref<8x1xf32, #tpu.memory_space<vmem>>, vector<8x1xf32>
    %c0_10 = arith.constant 0 : index
    %c0_11 = arith.constant 0 : index
    %8 = vector.load %arg9[%c0_10, %c0_11] : memref<1x128xf32, #tpu.memory_space<vmem>>, vector<1x128xf32>
    %9 = vector.broadcast %7 : vector<8x1xf32> to vector<8x128xf32>
    %10 = vector.broadcast %8 : vector<1x128xf32> to vector<8x128xf32>
    %11 = arith.mulf %9, %10 : vector<8x128xf32>
    %12 = arith.addf %6, %11 : vector<8x128xf32>
    %c0_12 = arith.constant 0 : index
    %c0_13 = arith.constant 0 : index
    %13 = vector.load %arg4[%c0_12, %c0_13] : memref<8x1xf32, #tpu.memory_space<vmem>>, vector<8x1xf32>
    %c0_14 = arith.constant 0 : index
    %c0_15 = arith.constant 0 : index
    %14 = vector.load %arg10[%c0_14, %c0_15] : memref<1x128xf32, #tpu.memory_space<vmem>>, vector<1x128xf32>
    %15 = vector.broadcast %13 : vector<8x1xf32> to vector<8x128xf32>
    %16 = vector.broadcast %14 : vector<1x128xf32> to vector<8x128xf32>
    %17 = arith.mulf %15, %16 : vector<8x128xf32>
    %18 = arith.addf %12, %17 : vector<8x128xf32>
    %c0_16 = arith.constant 0 : index
    %c0_17 = arith.constant 0 : index
    %19 = vector.load %arg5[%c0_16, %c0_17] : memref<8x5xf32, #tpu.memory_space<vmem>>, vector<8x5xf32>
    %c0_18 = arith.constant 0 : index
    %c0_19 = arith.constant 0 : index
    %20 = vector.load %arg11[%c0_18, %c0_19] : memref<5x128xf32, #tpu.memory_space<vmem>>, vector<5x128xf32>
    %cst_20 = arith.constant dense<0.000000e+00> : vector<8x128xf32>
    %21 = tpu.matmul %19, %20, %cst_20 {dimension_numbers = #tpu.dot_dimension_numbers<[1], [0], [0], [1], [0, 0, 1, 1], [], []>} : vector<8x5xf32>, vector<5x128xf32>, vector<8x128xf32> -> vector<8x128xf32>
    %22 = arith.addf %18, %21 : vector<8x128xf32>
    %c0_21 = arith.constant 0 : index
    %c0_22 = arith.constant 0 : index
    %23 = vector.load %arg6[%c0_21, %c0_22] : memref<8x1xf32, #tpu.memory_space<vmem>>, vector<8x1xf32>
    %c0_23 = arith.constant 0 : index
    %c0_24 = arith.constant 0 : index
    %24 = vector.load %arg12[%c0_23, %c0_24] : memref<1x128xf32, #tpu.memory_space<vmem>>, vector<1x128xf32>
    %25 = vector.broadcast %23 : vector<8x1xf32> to vector<8x128xf32>
    %26 = vector.broadcast %24 : vector<1x128xf32> to vector<8x128xf32>
    %27 = arith.mulf %25, %26 : vector<8x128xf32>
    %28 = arith.addf %22, %27 : vector<8x128xf32>
    %c0_25 = arith.constant 0 : index
    %c0_26 = arith.constant 0 : index
    %29 = vector.load %arg13[%c0_25, %c0_26] : memref<1x128xf32, #tpu.memory_space<vmem>>, vector<1x128xf32>
    %30 = vector.broadcast %29 : vector<1x128xf32> to vector<8x128xf32>
    %31 = arith.addf %28, %30 : vector<8x128xf32>
    %cst_27 = arith.constant 0.000000e+00 : f32
    %32 = vector.broadcast %cst_27 : f32 to vector<8x128xf32>
    %33 = arith.maximumf %31, %32 : vector<8x128xf32>
    %c0_28 = arith.constant 0 : index
    %c0_29 = arith.constant 0 : index
    %34 = vector.load %arg14[%c0_28, %c0_29] : memref<128x32xf32, #tpu.memory_space<vmem>>, vector<128x32xf32>
    %cst_30 = arith.constant dense<0.000000e+00> : vector<8x32xf32>
    %35 = tpu.matmul %33, %34, %cst_30 {dimension_numbers = #tpu.dot_dimension_numbers<[1], [0], [0], [1], [0, 0, 1, 1], [], []>} : vector<8x128xf32>, vector<128x32xf32>, vector<8x32xf32> -> vector<8x32xf32>
    %c0_31 = arith.constant 0 : index
    %c0_32 = arith.constant 0 : index
    %36 = vector.load %arg15[%c0_31, %c0_32] : memref<1x32xf32, #tpu.memory_space<vmem>>, vector<1x32xf32>
    %37 = vector.broadcast %36 : vector<1x32xf32> to vector<8x32xf32>
    %38 = arith.addf %35, %37 : vector<8x32xf32>
    %cst_33 = arith.constant 0.000000e+00 : f32
    %39 = vector.broadcast %cst_33 : f32 to vector<8x32xf32>
    %40 = arith.maximumf %38, %39 : vector<8x32xf32>
    %c0_34 = arith.constant 0 : index
    %c0_35 = arith.constant 0 : index
    %41 = vector.load %arg16[%c0_34, %c0_35] : memref<8x32xf32, #tpu.memory_space<vmem>>, vector<8x32xf32>
    tpu.vector_store %arg16[%c0_34, %c0_35], %40 {strides = array<i32>} : memref<8x32xf32, #tpu.memory_space<vmem>>, vector<8x32xf32>,
    return
  }
  func.func @transform_0(%arg0: i32) -> (i32, i32) {
    %c0_i32 = arith.constant 0 : i32
    %c0_i32_0 = arith.constant 0 : i32
    return %arg0, %c0_i32 : i32, i32
  }
  func.func @transform_1(%arg0: i32) -> (i32, i32) {
    %c0_i32 = arith.constant 0 : i32
    %c0_i32_0 = arith.constant 0 : i32
    return %arg0, %c0_i32 : i32, i32
  }
  func.func @transform_2(%arg0: i32) -> (i32, i32) {
    %c0_i32 = arith.constant 0 : i32
    %c0_i32_0 = arith.constant 0 : i32
    return %arg0, %c0_i32 : i32, i32
  }
  func.func @transform_3(%arg0: i32) -> (i32, i32) {
    %c0_i32 = arith.constant 0 : i32
    %c0_i32_0 = arith.constant 0 : i32
    return %arg0, %c0_i32 : i32, i32
  }
  func.func @transform_4(%arg0: i32) -> (i32, i32) {
    %c0_i32 = arith.constant 0 : i32
    %c0_i32_0 = arith.constant 0 : i32
    return %arg0, %c0_i32 : i32, i32
  }
  func.func @transform_5(%arg0: i32) -> (i32, i32) {
    %c0_i32 = arith.constant 0 : i32
    %c0_i32_0 = arith.constant 0 : i32
    return %arg0, %c0_i32 : i32, i32
  }
  func.func @transform_6(%arg0: i32) -> (i32, i32) {
    %c0_i32 = arith.constant 0 : i32
    %c0_i32_0 = arith.constant 0 : i32
    %c0_i32_1 = arith.constant 0 : i32
    return %c0_i32, %c0_i32_0 : i32, i32
  }
  func.func @transform_7(%arg0: i32) -> (i32, i32) {
    %c0_i32 = arith.constant 0 : i32
    %c0_i32_0 = arith.constant 0 : i32
    %c0_i32_1 = arith.constant 0 : i32
    return %c0_i32, %c0_i32_0 : i32, i32
  }
  func.func @transform_8(%arg0: i32) -> (i32, i32) {
    %c0_i32 = arith.constant 0 : i32
    %c0_i32_0 = arith.constant 0 : i32
    %c0_i32_1 = arith.constant 0 : i32
    return %c0_i32, %c0_i32_0 : i32, i32
  }
  func.func @transform_9(%arg0: i32) -> (i32, i32) {
    %c0_i32 = arith.constant 0 : i32
    %c0_i32_0 = arith.constant 0 : i32
    %c0_i32_1 = arith.constant 0 : i32
    return %c0_i32, %c0_i32_0 : i32, i32
  }
  func.func @transform_10(%arg0: i32) -> (i32, i32) {
    %c0_i32 = arith.constant 0 : i32
    %c0_i32_0 = arith.constant 0 : i32
    %c0_i32_1 = arith.constant 0 : i32
    return %c0_i32, %c0_i32_0 : i32, i32
  }
  func.func @transform_11(%arg0: i32) -> (i32, i32) {
    %c0_i32 = arith.constant 0 : i32
    %c0_i32_0 = arith.constant 0 : i32
    %c0_i32_1 = arith.constant 0 : i32
    return %c0_i32, %c0_i32_0 : i32, i32
  }
  func.func @transform_12(%arg0: i32) -> (i32, i32) {
    %c0_i32 = arith.constant 0 : i32
    %c0_i32_0 = arith.constant 0 : i32
    %c0_i32_1 = arith.constant 0 : i32
    return %c0_i32, %c0_i32_0 : i32, i32
  }
  func.func @transform_13(%arg0: i32) -> (i32, i32) {
    %c0_i32 = arith.constant 0 : i32
    %c0_i32_0 = arith.constant 0 : i32
    %c0_i32_1 = arith.constant 0 : i32
    return %c0_i32, %c0_i32_0 : i32, i32
  }
  func.func @transform_14(%arg0: i32) -> (i32, i32) {
    %c0_i32 = arith.constant 0 : i32
    %c0_i32_0 = arith.constant 0 : i32
    %c0_i32_1 = arith.constant 0 : i32
    return %c0_i32, %c0_i32_0 : i32, i32
  }
  func.func @transform_15(%arg0: i32) -> (i32, i32) {
    %c0_i32 = arith.constant 0 : i32
    %c0_i32_0 = arith.constant 0 : i32
    return %arg0, %c0_i32 : i32, i32
  }
}

</mosaic_0001>

<llo_original>
// kernel: tpu_custom_call.1
$region0: #{tpu_custom_call.1}
  #allocation0 [shape = 'u32[]', space=smem, size = 0x4, offset = 0x4, fixed_abs, tag = 'smem constant byte address 0x4 - core index']
  #allocation1 [shape = 'u32[144,128]{1,0:T(1,128)}', space=vmem, size = 0x12000, scoped, tag = 'internal scratch']
  %s0 = inlined_call_operand.vmem [shape: f32[16,16], index: 0, kind: input, shape index: {}]
  %s1 = inlined_call_operand.vmem [shape: f32[16,8], index: 1, kind: input, shape index: {}]
  %s2 = inlined_call_operand.vmem [shape: f32[16,1], index: 2, kind: input, shape index: {}]
  %s3 = inlined_call_operand.vmem [shape: f32[16,1], index: 3, kind: input, shape index: {}]
  %s4 = inlined_call_operand.vmem [shape: f32[16,5], index: 4, kind: input, shape index: {}]
  %s5 = inlined_call_operand.vmem [shape: f32[16,1], index: 5, kind: input, shape index: {}]
  %s6 = inlined_call_operand.vmem [shape: f32[16,128], index: 6, kind: input, shape index: {}]
  %s7 = inlined_call_operand.vmem [shape: f32[8,128], index: 7, kind: input, shape index: {}]
  %s8 = inlined_call_operand.vmem [shape: f32[1,128], index: 8, kind: input, shape index: {}]
  %s9 = inlined_call_operand.vmem [shape: f32[1,128], index: 9, kind: input, shape index: {}]
  %s10 = inlined_call_operand.vmem [shape: f32[5,128], index: 10, kind: input, shape index: {}]
  %s11 = inlined_call_operand.vmem [shape: f32[1,128], index: 11, kind: input, shape index: {}]
  %s12 = inlined_call_operand.vmem [shape: f32[1,128], index: 12, kind: input, shape index: {}]
  %s13 = inlined_call_operand.vmem [shape: f32[128,32], index: 13, kind: input, shape index: {}]
  %s14 = inlined_call_operand.vmem [shape: f32[1,32], index: 14, kind: input, shape index: {}]
  %s15 = inlined_call_operand.hbm [shape: f32[16,32], index: 15, kind: output, shape index: {}]
  %s16 = sld [smem:[#allocation0]]
  $region93: #{tpu_custom_call.1} parent=0
    _
  %s18 = ssub.s32 1, %s16
  %s19 = scalar_select 0, %s18, %s16
  $region1: #{tpu_custom_call.1} parent=0
    #allocation2 [shape = 'u8[8192]{0}', space=vmem, size = 0x2000, scoped, tag = 'output window, operand 0']
    #allocation3 [shape = 's32[2]{0}', space=sflag, size = 0x8, scoped, tag = 'scoped memory for tpu_custom_call.1']
    %20 = vsyncpa [#allocation3], 0
    %s21 = scalar_lea.sflag [#allocation3], 1
    %22 = vsyncpa %s21, 0
    loop: start=0, step=1, limit=4
    $region2: #{tpu_custom_call.1} parent=1 // loop_pre_header
      _
    $region3: #{tpu_custom_call.1} parent=1 // loop_header
      %s24 = sphi 0, %s28
      %p25 = scmp.ge.s32.totalorder %s24, 4
      %s34 = sphi 0, %s36
      %s37 = sphi 0, %s34
      %s38 = sphi 0, %s37
      %s54 = sphi 0, %s38
      %s60 = sphi 0, %s62
      %s63 = sphi 0, %s60
      %s64 = sphi 0, %s63
      %s80 = sphi 0, %s64
      %s86 = sphi 0, %s88
      %s89 = sphi 0, %s86
      %s90 = sphi 0, %s89
      %s106 = sphi 0, %s90
      %s112 = sphi 0, %s114
      %s115 = sphi 0, %s112
      %s116 = sphi 0, %s115
      %s132 = sphi 0, %s116
      %s138 = sphi 0, %s140
      %s141 = sphi 0, %s138
      %s142 = sphi 0, %s141
      %s158 = sphi 0, %s142
      %s164 = sphi 0, %s166
      %s167 = sphi 0, %s164
      %s168 = sphi 0, %s167
      %s184 = sphi 0, %s168
      %s188 = sphi 0, %s188
      %s190 = sphi 0, %s188
      %s191 = sphi 0, %s190
      %s205 = sphi 0, %s191
      %s209 = sphi 0, %s209
      %s211 = sphi 0, %s209
      %s212 = sphi 0, %s211
      %s226 = sphi 0, %s212
      %s230 = sphi 0, %s230
      %s232 = sphi 0, %s230
      %s233 = sphi 0, %s232
      %s247 = sphi 0, %s233
      %s251 = sphi 0, %s251
      %s253 = sphi 0, %s251
      %s254 = sphi 0, %s253
      %s268 = sphi 0, %s254
      %s272 = sphi 0, %s272
      %s274 = sphi 0, %s272
      %s275 = sphi 0, %s274
      %s289 = sphi 0, %s275
      %s293 = sphi 0, %s293
      %s295 = sphi 0, %s293
      %s296 = sphi 0, %s295
      %s310 = sphi 0, %s296
      %s314 = sphi 0, %s314
      %s316 = sphi 0, %s314
      %s317 = sphi 0, %s316
      %s331 = sphi 0, %s317
      %s335 = sphi 0, %s335
      %s337 = sphi 0, %s335
      %s338 = sphi 0, %s337
      %s352 = sphi 0, %s338
      %s356 = sphi 0, %s356
      %s358 = sphi 0, %s356
      %s359 = sphi 0, %s358
      %s373 = sphi 0, %s359
      %s379 = sphi 0, %s381
      %s382 = sphi 0, %s379
      %s383 = sphi 0, %s382
      %s399 = sphi 0, %s383
    $region4: #{tpu_custom_call.1} parent=1 // loop_header_branch
      %27 = sbr.rel (%p25) target = $region8
    $region5: #{tpu_custom_call.1} parent=1 // loop_body
      %s29 = ssub.s32 %s24, 1
      %s30 = ssub.s32 %s24, 2
      %s31 = sadd.s32 %s24, 1
      %s32 = ssub.s32 %s24, %s31
      %p33 = scmp.eq.s32.totalorder %s32, 0
      %s35 = sadd.s32 %s34, 1
      %s36 = scalar_select %p33, %s34, %s35
      %p39 = pneg %p33
      %p40 = scmp.eq.s32.totalorder %s24, 1
      %p41 = por %p39, %p40
      %p42 = scmp.ne.s32.totalorder %s34, %s37
      %p43 = scmp.eq.s32.totalorder %s24, 0
      %p44 = por %p42, %p43
      %p45 = scmp.ne.s32.totalorder %s34, %s37
      %p46 = scmp.eq.s32.totalorder %s29, 1
      %p47 = por %p45, %p46
      %p48 = scmp.ne.s32.totalorder %s37, %s38
      %p49 = scmp.eq.s32.totalorder %s29, 0
      %p50 = por %p48, %p49
      %p51 = scmp.ne.s32.totalorder %s37, %s38
      %p52 = scmp.eq.s32.totalorder %s30, 1
      %p53 = por %p51, %p52
      %p55 = scmp.ne.s32.totalorder %s38, %s54
      %p56 = scmp.eq.s32.totalorder %s30, 0
      %p57 = por %p55, %p56
      %s58 = ssub.s32 %s24, %s31
      %p59 = scmp.eq.s32.totalorder %s58, 0
      %s61 = sadd.s32 %s60, 1
      %s62 = scalar_select %p59, %s60, %s61
      %p65 = pneg %p59
      %p66 = scmp.eq.s32.totalorder %s24, 1
      %p67 = por %p65, %p66
      %p68 = scmp.ne.s32.totalorder %s60, %s63
      %p69 = scmp.eq.s32.totalorder %s24, 0
      %p70 = por %p68, %p69
      %p71 = scmp.ne.s32.totalorder %s60, %s63
      %p72 = scmp.eq.s32.totalorder %s29, 1
      %p73 = por %p71, %p72
      %p74 = scmp.ne.s32.totalorder %s63, %s64
      %p75 = scmp.eq.s32.totalorder %s29, 0
      %p76 = por %p74, %p75
      %p77 = scmp.ne.s32.totalorder %s63, %s64
      %p78 = scmp.eq.s32.totalorder %s30, 1
      %p79 = por %p77, %p78
      %p81 = scmp.ne.s32.totalorder %s64, %s80
      %p82 = scmp.eq.s32.totalorder %s30, 0
      %p83 = por %p81, %p82
      %s84 = ssub.s32 %s24, %s31
      %p85 = scmp.eq.s32.totalorder %s84, 0
      %s87 = sadd.s32 %s86, 1
      %s88 = scalar_select %p85, %s86, %s87
      %p91 = pneg %p85
      %p92 = scmp.eq.s32.totalorder %s24, 1
      %p93 = por %p91, %p92
      %p94 = scmp.ne.s32.totalorder %s86, %s89
      %p95 = scmp.eq.s32.totalorder %s24, 0
      %p96 = por %p94, %p95
      %p97 = scmp.ne.s32.totalorder %s86, %s89
      %p98 = scmp.eq.s32.totalorder %s29, 1
      %p99 = por %p97, %p98
      %p100 = scmp.ne.s32.totalorder %s89, %s90
      %p101 = scmp.eq.s32.totalorder %s29, 0
      %p102 = por %p100, %p101
      %p103 = scmp.ne.s32.totalorder %s89, %s90
      %p104 = scmp.eq.s32.totalorder %s30, 1
      %p105 = por %p103, %p104
      %p107 = scmp.ne.s32.totalorder %s90, %s106
      %p108 = scmp.eq.s32.totalorder %s30, 0
      %p109 = por %p107, %p108
      %s110 = ssub.s32 %s24, %s31
      %p111 = scmp.eq.s32.totalorder %s110, 0
      %s113 = sadd.s32 %s112, 1
      %s114 = scalar_select %p111, %s112, %s113
      %p117 = pneg %p111
      %p118 = scmp.eq.s32.totalorder %s24, 1
      %p119 = por %p117, %p118
      %p120 = scmp.ne.s32.totalorder %s112, %s115
      %p121 = scmp.eq.s32.totalorder %s24, 0
      %p122 = por %p120, %p121
      %p123 = scmp.ne.s32.totalorder %s112, %s115
      %p124 = scmp.eq.s32.totalorder %s29, 1
      %p125 = por %p123, %p124
      %p126 = scmp.ne.s32.totalorder %s115, %s116
      %p127 = scmp.eq.s32.totalorder %s29, 0
      %p128 = por %p126, %p127
      %p129 = scmp.ne.s32.totalorder %s115, %s116
      %p130 = scmp.eq.s32.totalorder %s30, 1
      %p131 = por %p129, %p130
      %p133 = scmp.ne.s32.totalorder %s116, %s132
      %p134 = scmp.eq.s32.totalorder %s30, 0
      %p135 = por %p133, %p134
      %s136 = ssub.s32 %s24, %s31
      %p137 = scmp.eq.s32.totalorder %s136, 0
      %s139 = sadd.s32 %s138, 1
      %s140 = scalar_select %p137, %s138, %s139
      %p143 = pneg %p137
      %p144 = scmp.eq.s32.totalorder %s24, 1
      %p145 = por %p143, %p144
      %p146 = scmp.ne.s32.totalorder %s138, %s141
      %p147 = scmp.eq.s32.totalorder %s24, 0
      %p148 = por %p146, %p147
      %p149 = scmp.ne.s32.totalorder %s138, %s141
      %p150 = scmp.eq.s32.totalorder %s29, 1
      %p151 = por %p149, %p150
      %p152 = scmp.ne.s32.totalorder %s141, %s142
      %p153 = scmp.eq.s32.totalorder %s29, 0
      %p154 = por %p152, %p153
      %p155 = scmp.ne.s32.totalorder %s141, %s142
      %p156 = scmp.eq.s32.totalorder %s30, 1
      %p157 = por %p155, %p156
      %p159 = scmp.ne.s32.totalorder %s142, %s158
      %p160 = scmp.eq.s32.totalorder %s30, 0
      %p161 = por %p159, %p160
      %s162 = ssub.s32 %s24, %s31
      %p163 = scmp.eq.s32.totalorder %s162, 0
      %s165 = sadd.s32 %s164, 1
      %s166 = scalar_select %p163, %s164, %s165
      %p169 = pneg %p163
      %p170 = scmp.eq.s32.totalorder %s24, 1
      %p171 = por %p169, %p170
      %p172 = scmp.ne.s32.totalorder %s164, %s167
      %p173 = scmp.eq.s32.totalorder %s24, 0
      %p174 = por %p172, %p173
      %p175 = scmp.ne.s32.totalorder %s164, %s167
      %p176 = scmp.eq.s32.totalorder %s29, 1
      %p177 = por %p175, %p176
      %p178 = scmp.ne.s32.totalorder %s167, %s168
      %p179 = scmp.eq.s32.totalorder %s29, 0
      %p180 = por %p178, %p179
      %p181 = scmp.ne.s32.totalorder %s167, %s168
      %p182 = scmp.eq.s32.totalorder %s30, 1
      %p183 = por %p181, %p182
      %p185 = scmp.ne.s32.totalorder %s168, %s184
      %p186 = scmp.eq.s32.totalorder %s30, 0
      %p187 = por %p185, %p186
      %s189 = sadd.s32 %s188, 1
      %p192 = scmp.eq.s32.totalorder %s24, 1
      %p193 = scmp.ne.s32.totalorder %s188, %s190
      %p194 = scmp.eq.s32.totalorder %s24, 0
      %p195 = por %p193, %p194
      %p196 = scmp.ne.s32.totalorder %s188, %s190
      %p197 = scmp.eq.s32.totalorder %s29, 1
      %p198 = por %p196, %p197
      %p199 = scmp.ne.s32.totalorder %s190, %s191
      %p200 = scmp.eq.s32.totalorder %s29, 0
      %p201 = por %p199, %p200
      %p202 = scmp.ne.s32.totalorder %s190, %s191
      %p203 = scmp.eq.s32.totalorder %s30, 1
      %p204 = por %p202, %p203
      %p206 = scmp.ne.s32.totalorder %s191, %s205
      %p207 = scmp.eq.s32.totalorder %s30, 0
      %p208 = por %p206, %p207
      %s210 = sadd.s32 %s209, 1
      %p213 = scmp.eq.s32.totalorder %s24, 1
      %p214 = scmp.ne.s32.totalorder %s209, %s211
      %p215 = scmp.eq.s32.totalorder %s24, 0
      %p216 = por %p214, %p215
      %p217 = scmp.ne.s32.totalorder %s209, %s211
      %p218 = scmp.eq.s32.totalorder %s29, 1
      %p219 = por %p217, %p218
      %p220 = scmp.ne.s32.totalorder %s211, %s212
      %p221 = scmp.eq.s32.totalorder %s29, 0
      %p222 = por %p220, %p221
      %p223 = scmp.ne.s32.totalorder %s211, %s212
      %p224 = scmp.eq.s32.totalorder %s30, 1
      %p225 = por %p223, %p224
      %p227 = scmp.ne.s32.totalorder %s212, %s226
      %p228 = scmp.eq.s32.totalorder %s30, 0
      %p229 = por %p227, %p228
      %s231 = sadd.s32 %s230, 1
      %p234 = scmp.eq.s32.totalorder %s24, 1
      %p235 = scmp.ne.s32.totalorder %s230, %s232
      %p236 = scmp.eq.s32.totalorder %s24, 0
      %p237 = por %p235, %p236
      %p238 = scmp.ne.s32.totalorder %s230, %s232
      %p239 = scmp.eq.s32.totalorder %s29, 1
      %p240 = por %p238, %p239
      %p241 = scmp.ne.s32.totalorder %s232, %s233
      %p242 = scmp.eq.s32.totalorder %s29, 0
      %p243 = por %p241, %p242
      %p244 = scmp.ne.s32.totalorder %s232, %s233
      %p245 = scmp.eq.s32.totalorder %s30, 1
      %p246 = por %p244, %p245
      %p248 = scmp.ne.s32.totalorder %s233, %s247
      %p249 = scmp.eq.s32.totalorder %s30, 0
      %p250 = por %p248, %p249
      %s252 = sadd.s32 %s251, 1
      %p255 = scmp.eq.s32.totalorder %s24, 1
      %p256 = scmp.ne.s32.totalorder %s251, %s253
      %p257 = scmp.eq.s32.totalorder %s24, 0
      %p258 = por %p256, %p257
      %p259 = scmp.ne.s32.totalorder %s251, %s253
      %p260 = scmp.eq.s32.totalorder %s29, 1
      %p261 = por %p259, %p260
      %p262 = scmp.ne.s32.totalorder %s253, %s254
      %p263 = scmp.eq.s32.totalorder %s29, 0
      %p264 = por %p262, %p263
      %p265 = scmp.ne.s32.totalorder %s253, %s254
      %p266 = scmp.eq.s32.totalorder %s30, 1
      %p267 = por %p265, %p266
      %p269 = scmp.ne.s32.totalorder %s254, %s268
      %p270 = scmp.eq.s32.totalorder %s30, 0
      %p271 = por %p269, %p270
      %s273 = sadd.s32 %s272, 1
      %p276 = scmp.eq.s32.totalorder %s24, 1
      %p277 = scmp.ne.s32.totalorder %s272, %s274
      %p278 = scmp.eq.s32.totalorder %s24, 0
      %p279 = por %p277, %p278
      %p280 = scmp.ne.s32.totalorder %s272, %s274
      %p281 = scmp.eq.s32.totalorder %s29, 1
      %p282 = por %p280, %p281
      %p283 = scmp.ne.s32.totalorder %s274, %s275
      %p284 = scmp.eq.s32.totalorder %s29, 0
      %p285 = por %p283, %p284
      %p286 = scmp.ne.s32.totalorder %s274, %s275
      %p287 = scmp.eq.s32.totalorder %s30, 1
      %p288 = por %p286, %p287
      %p290 = scmp.ne.s32.totalorder %s275, %s289
      %p291 = scmp.eq.s32.totalorder %s30, 0
      %p292 = por %p290, %p291
      %s294 = sadd.s32 %s293, 1
      %p297 = scmp.eq.s32.totalorder %s24, 1
      %p298 = scmp.ne.s32.totalorder %s293, %s295
      %p299 = scmp.eq.s32.totalorder %s24, 0
      %p300 = por %p298, %p299
      %p301 = scmp.ne.s32.totalorder %s293, %s295
      %p302 = scmp.eq.s32.totalorder %s29, 1
      %p303 = por %p301, %p302
      %p304 = scmp.ne.s32.totalorder %s295, %s296
      %p305 = scmp.eq.s32.totalorder %s29, 0
      %p306 = por %p304, %p305
      %p307 = scmp.ne.s32.totalorder %s295, %s296
      %p308 = scmp.eq.s32.totalorder %s30, 1
      %p309 = por %p307, %p308
      %p311 = scmp.ne.s32.totalorder %s296, %s310
      %p312 = scmp.eq.s32.totalorder %s30, 0
      %p313 = por %p311, %p312
      %s315 = sadd.s32 %s314, 1
      %p318 = scmp.eq.s32.totalorder %s24, 1
      %p319 = scmp.ne.s32.totalorder %s314, %s316
      %p320 = scmp.eq.s32.totalorder %s24, 0
      %p321 = por %p319, %p320
      %p322 = scmp.ne.s32.totalorder %s314, %s316
      %p323 = scmp.eq.s32.totalorder %s29, 1
      %p324 = por %p322, %p323
      %p325 = scmp.ne.s32.totalorder %s316, %s317
      %p326 = scmp.eq.s32.totalorder %s29, 0
      %p327 = por %p325, %p326
      %p328 = scmp.ne.s32.totalorder %s316, %s317
      %p329 = scmp.eq.s32.totalorder %s30, 1
      %p330 = por %p328, %p329
      %p332 = scmp.ne.s32.totalorder %s317, %s331
      %p333 = scmp.eq.s32.totalorder %s30, 0
      %p334 = por %p332, %p333
      %s336 = sadd.s32 %s335, 1
      %p339 = scmp.eq.s32.totalorder %s24, 1
      %p340 = scmp.ne.s32.totalorder %s335, %s337
      %p341 = scmp.eq.s32.totalorder %s24, 0
      %p342 = por %p340, %p341
      %p343 = scmp.ne.s32.totalorder %s335, %s337
      %p344 = scmp.eq.s32.totalorder %s29, 1
      %p345 = por %p343, %p344
      %p346 = scmp.ne.s32.totalorder %s337, %s338
      %p347 = scmp.eq.s32.totalorder %s29, 0
      %p348 = por %p346, %p347
      %p349 = scmp.ne.s32.totalorder %s337, %s338
      %p350 = scmp.eq.s32.totalorder %s30, 1
      %p351 = por %p349, %p350
      %p353 = scmp.ne.s32.totalorder %s338, %s352
      %p354 = scmp.eq.s32.totalorder %s30, 0
      %p355 = por %p353, %p354
      %s357 = sadd.s32 %s356, 1
      %p360 = scmp.eq.s32.totalorder %s24, 1
      %p361 = scmp.ne.s32.totalorder %s356, %s358
      %p362 = scmp.eq.s32.totalorder %s24, 0
      %p363 = por %p361, %p362
      %p364 = scmp.ne.s32.totalorder %s356, %s358
      %p365 = scmp.eq.s32.totalorder %s29, 1
      %p366 = por %p364, %p365
      %p367 = scmp.ne.s32.totalorder %s358, %s359
      %p368 = scmp.eq.s32.totalorder %s29, 0
      %p369 = por %p367, %p368
      %p370 = scmp.ne.s32.totalorder %s358, %s359
      %p371 = scmp.eq.s32.totalorder %s30, 1
      %p372 = por %p370, %p371
      %p374 = scmp.ne.s32.totalorder %s359, %s373
      %p375 = scmp.eq.s32.totalorder %s30, 0
      %p376 = por %p374, %p375
      %s377 = ssub.s32 %s24, %s31
      %p378 = scmp.eq.s32.totalorder %s377, 0
      %s380 = sadd.s32 %s379, 1
      %s381 = scalar_select %p378, %s379, %s380
      %p384 = pneg %p378
      %p385 = scmp.eq.s32.totalorder %s24, 1
      %p386 = por %p384, %p385
      %p387 = scmp.ne.s32.totalorder %s379, %s382
      %p388 = scmp.eq.s32.totalorder %s24, 0
      %p389 = por %p387, %p388
      %p390 = scmp.ne.s32.totalorder %s379, %s382
      %p391 = scmp.eq.s32.totalorder %s29, 1
      %p392 = por %p390, %p391
      %p393 = scmp.ne.s32.totalorder %s382, %s383
      %p394 = scmp.eq.s32.totalorder %s29, 0
      %p395 = por %p393, %p394
      %p396 = scmp.ne.s32.totalorder %s382, %s383
      %p397 = scmp.eq.s32.totalorder %s30, 1
      %p398 = por %p396, %p397
      %p400 = scmp.ne.s32.totalorder %s383, %s399
      %p401 = scmp.eq.s32.totalorder %s30, 0
      %p402 = por %p400, %p401
      %p403 = scmp.le.s32.totalorder 1, %s24
      %p404 = scmp.lt.s32.totalorder %s24, 3
      %p405 = pnand %p403, %p404
      %p406 = pneg %p405
      // Predicated region
      $region9: #{tpu_custom_call.1} parent=5 // pred_check
        _
      $region10: #{tpu_custom_call.1} parent=5 // pred_check_branch
        %408 = sbr.rel (%p405) target = $region12
      $region11: #{tpu_custom_call.1} parent=5 // pred_region
        %s409 = ssub.s32 %s24, 1
        // Predicated region
        $region13: #{tpu_custom_call.1} parent=11 // pred_check
          %p410 = pneg %p201
        $region14: #{tpu_custom_call.1} parent=11 // pred_check_branch
          %412 = sbr.rel (%p410) target = $region16
        $region15: #{tpu_custom_call.1} parent=11 // pred_region
          _
        $region16: #{tpu_custom_call.1} parent=11 // pred_fallthru
          _
        // Predicated region
        $region17: #{tpu_custom_call.1} parent=11 // pred_check
          %p413 = pneg %p222
        $region18: #{tpu_custom_call.1} parent=11 // pred_check_branch
          %415 = sbr.rel (%p413) target = $region20
        $region19: #{tpu_custom_call.1} parent=11 // pred_region
          _
        $region20: #{tpu_custom_call.1} parent=11 // pred_fallthru
          _
        // Predicated region
        $region21: #{tpu_custom_call.1} parent=11 // pred_check
          %p416 = pneg %p243
        $region22: #{tpu_custom_call.1} parent=11 // pred_check_branch
          %418 = sbr.rel (%p416) target = $region24
        $region23: #{tpu_custom_call.1} parent=11 // pred_region
          _
        $region24: #{tpu_custom_call.1} parent=11 // pred_fallthru
          _
        // Predicated region
        $region25: #{tpu_custom_call.1} parent=11 // pred_check
          %p419 = pneg %p264
        $region26: #{tpu_custom_call.1} parent=11 // pred_check_branch
          %421 = sbr.rel (%p419) target = $region28
        $region27: #{tpu_custom_call.1} parent=11 // pred_region
          _
        $region28: #{tpu_custom_call.1} parent=11 // pred_fallthru
          _
        // Predicated region
        $region29: #{tpu_custom_call.1} parent=11 // pred_check
          %p422 = pneg %p285
        $region30: #{tpu_custom_call.1} parent=11 // pred_check_branch
          %424 = sbr.rel (%p422) target = $region32
        $region31: #{tpu_custom_call.1} parent=11 // pred_region
          _
        $region32: #{tpu_custom_call.1} parent=11 // pred_fallthru
          _
        // Predicated region
        $region33: #{tpu_custom_call.1} parent=11 // pred_check
          %p425 = pneg %p306
        $region34: #{tpu_custom_call.1} parent=11 // pred_check_branch
          %427 = sbr.rel (%p425) target = $region36
        $region35: #{tpu_custom_call.1} parent=11 // pred_region
          _
        $region36: #{tpu_custom_call.1} parent=11 // pred_fallthru
          _
        // Predicated region
        $region37: #{tpu_custom_call.1} parent=11 // pred_check
          %p428 = pneg %p327
        $region38: #{tpu_custom_call.1} parent=11 // pred_check_branch
          %430 = sbr.rel (%p428) target = $region40
        $region39: #{tpu_custom_call.1} parent=11 // pred_region
          _
        $region40: #{tpu_custom_call.1} parent=11 // pred_fallthru
          _
        // Predicated region
        $region41: #{tpu_custom_call.1} parent=11 // pred_check
          %p431 = pneg %p348
        $region42: #{tpu_custom_call.1} parent=11 // pred_check_branch
          %433 = sbr.rel (%p431) target = $region44
        $region43: #{tpu_custom_call.1} parent=11 // pred_region
          _
        $region44: #{tpu_custom_call.1} parent=11 // pred_fallthru
          _
        // Predicated region
        $region45: #{tpu_custom_call.1} parent=11 // pred_check
          %p434 = pneg %p369
        $region46: #{tpu_custom_call.1} parent=11 // pred_check_branch
          %436 = sbr.rel (%p434) target = $region48
        $region47: #{tpu_custom_call.1} parent=11 // pred_region
          _
        $region48: #{tpu_custom_call.1} parent=11 // pred_fallthru
          _
      $region12: #{tpu_custom_call.1} parent=5 // pred_fallthru
        _
      %p437 = scmp.lt.s32.totalorder %s24, 2
      // Predicated region
      $region49: #{tpu_custom_call.1} parent=5 // pred_check
        %p438 = pneg %p437
      $region50: #{tpu_custom_call.1} parent=5 // pred_check_branch
        %440 = sbr.rel (%p438) target = $region52
      $region51: #{tpu_custom_call.1} parent=5 // pred_region
        // Predicated region
        $region53: #{tpu_custom_call.1} parent=51 // pred_check
          %p441 = pneg %p44
        $region54: #{tpu_custom_call.1} parent=51 // pred_check_branch
          %443 = sbr.rel (%p441) target = $region56
        $region55: #{tpu_custom_call.1} parent=51 // pred_region
          %p444 = scmp.lt.s32.totalorder %s24, 1
          %s445 = scalar_select %p444, %s24, 1
          %s446 = smul.addr %s445, 8
          %s447 = scalar_lea.vmem %s0, %s446
        $region56: #{tpu_custom_call.1} parent=51 // pred_fallthru
          _
        // Predicated region
        $region57: #{tpu_custom_call.1} parent=51 // pred_check
          %p448 = pneg %p70
        $region58: #{tpu_custom_call.1} parent=51 // pred_check_branch
          %450 = sbr.rel (%p448) target = $region60
        $region59: #{tpu_custom_call.1} parent=51 // pred_region
          %p451 = scmp.lt.s32.totalorder %s24, 1
          %s452 = scalar_select %p451, %s24, 1
          %s453 = smul.addr %s452, 8
          %s454 = scalar_lea.vmem %s1, %s453
        $region60: #{tpu_custom_call.1} parent=51 // pred_fallthru
          _
        // Predicated region
        $region61: #{tpu_custom_call.1} parent=51 // pred_check
          %p455 = pneg %p96
        $region62: #{tpu_custom_call.1} parent=51 // pred_check_branch
          %457 = sbr.rel (%p455) target = $region64
        $region63: #{tpu_custom_call.1} parent=51 // pred_region
          %p458 = scmp.lt.s32.totalorder %s24, 1
          %s459 = scalar_select %p458, %s24, 1
          %s460 = smul.addr %s459, 8
          %s461 = scalar_lea.vmem %s2, %s460
        $region64: #{tpu_custom_call.1} parent=51 // pred_fallthru
          _
        // Predicated region
        $region65: #{tpu_custom_call.1} parent=51 // pred_check
          %p462 = pneg %p122
        $region66: #{tpu_custom_call.1} parent=51 // pred_check_branch
          %464 = sbr.rel (%p462) target = $region68
        $region67: #{tpu_custom_call.1} parent=51 // pred_region
          %p465 = scmp.lt.s32.totalorder %s24, 1
          %s466 = scalar_select %p465, %s24, 1
          %s467 = smul.addr %s466, 8
          %s468 = scalar_lea.vmem %s3, %s467
        $region68: #{tpu_custom_call.1} parent=51 // pred_fallthru
          _
        // Predicated region
        $region69: #{tpu_custom_call.1} parent=51 // pred_check
          %p469 = pneg %p148
        $region70: #{tpu_custom_call.1} parent=51 // pred_check_branch
          %471 = sbr.rel (%p469) target = $region72
        $region71: #{tpu_custom_call.1} parent=51 // pred_region
          %p472 = scmp.lt.s32.totalorder %s24, 1
          %s473 = scalar_select %p472, %s24, 1
          %s474 = smul.addr %s473, 8
          %s475 = scalar_lea.vmem %s4, %s474
        $region72: #{tpu_custom_call.1} parent=51 // pred_fallthru
          _
        // Predicated region
        $region73: #{tpu_custom_call.1} parent=51 // pred_check
          %p476 = pneg %p174
        $region74: #{tpu_custom_call.1} parent=51 // pred_check_branch
          %478 = sbr.rel (%p476) target = $region76
        $region75: #{tpu_custom_call.1} parent=51 // pred_region
          %p479 = scmp.lt.s32.totalorder %s24, 1
          %s480 = scalar_select %p479, %s24, 1
          %s481 = smul.addr %s480, 8
          %s482 = scalar_lea.vmem %s5, %s481
        $region76: #{tpu_custom_call.1} parent=51 // pred_fallthru
          _
      $region52: #{tpu_custom_call.1} parent=5 // pred_fallthru
        _
      %p483 = scmp.le.s32.totalorder 1, %s24
      %p484 = scmp.lt.s32.totalorder %s24, 3
      %p485 = pnand %p483, %p484
      %p486 = pneg %p485
      // Predicated region
      $region77: #{tpu_custom_call.1} parent=5 // pred_check
        _
      $region78: #{tpu_custom_call.1} parent=5 // pred_check_branch
        %488 = sbr.rel (%p485) target = $region80
      $region79: #{tpu_custom_call.1} parent=5 // pred_region
        %s489 = ssub.s32 %s24, 1
        %p490 = scmp.lt.s32.totalorder %s29, 1
        %s491 = scalar_select %p490, %s29, 1
        %s492 = smul.addr %s491, 8
        %s493 = scalar_lea.vmem %s0, %s492
        %p494 = pneg %p50
        %p495 = pneg %p47
        %p496 = scmp.lt.s32.totalorder %s29, 1
        %s497 = scalar_select %p496, %s29, 1
        %s498 = smul.addr %s497, 8
        %s499 = scalar_lea.vmem %s1, %s498
        %p500 = pneg %p76
        %p501 = pneg %p73
        %p502 = scmp.lt.s32.totalorder %s29, 1
        %s503 = scalar_select %p502, %s29, 1
        %s504 = smul.addr %s503, 8
        %s505 = scalar_lea.vmem %s2, %s504
        %p506 = pneg %p102
        %p507 = pneg %p99
        %p508 = scmp.lt.s32.totalorder %s29, 1
        %s509 = scalar_select %p508, %s29, 1
        %s510 = smul.addr %s509, 8
        %s511 = scalar_lea.vmem %s3, %s510
        %p512 = pneg %p128
        %p513 = pneg %p125
        %p514 = scmp.lt.s32.totalorder %s29, 1
        %s515 = scalar_select %p514, %s29, 1
        %s516 = smul.addr %s515, 8
        %s517 = scalar_lea.vmem %s4, %s516
        %p518 = pneg %p154
        %p519 = pneg %p151
        %p520 = scmp.lt.s32.totalorder %s29, 1
        %s521 = scalar_select %p520, %s29, 1
        %s522 = smul.addr %s521, 8
        %s523 = scalar_lea.vmem %s5, %s522
        %p524 = pneg %p180
        %p525 = pneg %p177
        %p526 = pneg %p201
        %p527 = pneg %p198
        %p528 = pneg %p222
        %p529 = pneg %p219
        %p530 = pneg %p243
        %p531 = pneg %p240
        %p532 = pneg %p264
        %p533 = pneg %p261
        %p534 = pneg %p285
        %p535 = pneg %p282
        %p536 = pneg %p306
        %p537 = pneg %p303
        %p538 = pneg %p327
        %p539 = pneg %p324
        %p540 = pneg %p348
        %p541 = pneg %p345
        %p542 = pneg %p369
        %p543 = pneg %p366
        %p544 = pneg %p395
        %p545 = pneg %p392
        %s546 = sand.u32 %s382, 1
        %s547 = scalar_lea.sflag [#allocation3], %s546
        %s548 = sand.u32 %s382, 1
        %s549 = smul.addr %s548, 8
        %s550 = scalar_lea.vmem [#allocation2], %s549
        %p551 = scmp.lt.s32.totalorder %s29, 1
        %s552 = scalar_select %p551, %s29, 1
        %s553 = smul.addr %s552, 8
        %s554 = scalar_lea.vmem %s0, %s553
        %p555 = scmp.lt.s32.totalorder %s29, 1
        %s556 = scalar_select %p555, %s29, 1
        %s557 = smul.addr %s556, 8
        %s558 = scalar_lea.vmem %s1, %s557
        %p559 = scmp.lt.s32.totalorder %s29, 1
        %s560 = scalar_select %p559, %s29, 1
        %s561 = smul.addr %s560, 8
        %s562 = scalar_lea.vmem %s2, %s561
        %p563 = scmp.lt.s32.totalorder %s29, 1
        %s564 = scalar_select %p563, %s29, 1
        %s565 = smul.addr %s564, 8
        %s566 = scalar_lea.vmem %s3, %s565
        %p567 = scmp.lt.s32.totalorder %s29, 1
        %s568 = scalar_select %p567, %s29, 1
        %s569 = smul.addr %s568, 8
        %s570 = scalar_lea.vmem %s4, %s569
        %p571 = scmp.lt.s32.totalorder %s29, 1
        %s572 = scalar_select %p571, %s29, 1
        %s573 = smul.addr %s572, 8
        %s574 = scalar_lea.vmem %s5, %s573
        %v575 = vld [vmem:[%s554] sm:$0xff]
        %v576 = vld [vmem:[%s6] sm:$0xff]
        %v577 = vld [vmem:[%s6 + $0x8] sm:$0xff]
        %v578 = vld [vmem:[%s558] sm:$0xff]
        %v579 = vld [vmem:[%s7] sm:$0xff]
        %vm580 = vcmask 64512
        %v582 = vsel %vm580, %v578, 0
        %584 = vmatprep.subr.mxu0 0.0
        %585 = vmatpush1.msra.mxu0 %v579
        %586 = vmatprep.subr.mxu0 0.0
        %587 = vmatpush1.msra.mxu0 0.0
        %588 = vmatprep.subr.mxu0 0.0
        %589 = vmatpush1.msra.mxu0 0.0
        %590 = vmatprep.subr.mxu0 0.0
        %591 = vmatpush1.msra.mxu0 0.0
        %592 = vmatprep.subr.mxu0 0.0
        %593 = vmatpush1.msra.mxu0 0.0
        %594 = vmatprep.subr.mxu0 0.0
        %595 = vmatpush1.msra.mxu0 0.0
        %596 = vmatprep.subr.mxu0 0.0
        %597 = vmatpush1.msra.mxu0 0.0
        %598 = vmatprep.subr.mxu0 0.0
        %599 = vmatpush1.msra.mxu0 0.0
        %600 = vmatprep.subr.mxu0 0.0
        %601 = vmatpush1.msra.mxu0 0.0
        %602 = vmatprep.subr.mxu0 0.0
        %603 = vmatpush1.msra.mxu0 0.0
        %604 = vmatprep.subr.mxu0 0.0
        %605 = vmatpush1.msra.mxu0 0.0
        %606 = vmatprep.subr.mxu0 0.0
        %607 = vmatpush1.msra.mxu0 0.0
        %608 = vmatprep.subr.mxu0 0.0
        %609 = vmatpush1.msra.mxu0 0.0
        %610 = vmatprep.subr.mxu0 0.0
        %611 = vmatpush1.msra.mxu0 0.0
        %612 = vmatprep.subr.mxu0 0.0
        %613 = vmatpush1.msra.mxu0 0.0
        %614 = vmatprep.subr.mxu0 0.0
        %615 = vmatpush1.msra.mxu0 0.0
        %616 = vmatprep.subr.mxu0 0.0
        %617 = vmatpush1.msra.mxu0 0.0
        %618 = vmatprep.subr.mxu0 0.0
        %619 = vmatpush1.msra.mxu0 0.0
        %620 = vmatprep.subr.mxu0 0.0
        %621 = vmatpush1.msra.mxu0 0.0
        %622 = vmatprep.subr.mxu0 0.0
        %623 = vmatpush1.msra.mxu0 0.0
        %624 = vmatprep.subr.mxu0 0.0
        %625 = vmatpush1.msra.mxu0 0.0
        %626 = vmatprep.subr.mxu0 0.0
        %627 = vmatpush1.msra.mxu0 0.0
        %628 = vmatprep.subr.mxu0 0.0
        %629 = vmatpush1.msra.mxu0 0.0
        %630 = vmatprep.subr.mxu0 0.0
        %631 = vmatpush1.msra.mxu0 0.0
        %632 = vmatprep.subr.mxu0 0.0
        %633 = vmatpush1.msra.mxu0 0.0
        %634 = vmatprep.subr.mxu0 0.0
        %635 = vmatpush1.msra.mxu0 0.0
        %636 = vmatprep.subr.mxu0 0.0
        %637 = vmatpush1.msra.mxu0 0.0
        %638 = vmatprep.subr.mxu0 0.0
        %639 = vmatpush1.msra.mxu0 0.0
        %640 = vmatprep.subr.mxu0 0.0
        %641 = vmatpush1.msra.mxu0 0.0
        %642 = vmatprep.subr.mxu0 0.0
        %643 = vmatpush1.msra.mxu0 0.0
        %644 = vmatprep.subr.mxu0 0.0
        %645 = vmatpush1.msra.mxu0 0.0
        %646 = vmatprep.subr.mxu0 0.0
        %647 = vmatpush1.msra.mxu0 0.0
        %648 = vmatprep.mubr.f32.mxu0 0.0
        %649 = vmatmul.mubr.f32.gmra.mrb[0].mxu0 %v582
        %v650 = vpop.f32.mrb[0].mxu0
        %v651 = vadd.f32 0.0, %v650
        %v652 = vpop.f32.mrb[0].mxu0
        %653 = vdwg.mxu0
        %vm654 = vcmask 130048
        %v656 = vsel %vm654, %v575, 0
        %658 = vmatprep.subr.mxu0 0.0
        %659 = vmatpush1.msra.mxu0 %v576
        %660 = vmatprep.subr.mxu0 0.0
        %661 = vmatpush1.msra.mxu0 %v577
        %662 = vmatprep.subr.mxu0 0.0
        %663 = vmatpush1.msra.mxu0 0.0
        %664 = vmatprep.subr.mxu0 0.0
        %665 = vmatpush1.msra.mxu0 0.0
        %666 = vmatprep.subr.mxu0 0.0
        %667 = vmatpush1.msra.mxu0 0.0
        %668 = vmatprep.subr.mxu0 0.0
        %669 = vmatpush1.msra.mxu0 0.0
        %670 = vmatprep.subr.mxu0 0.0
        %671 = vmatpush1.msra.mxu0 0.0
        %672 = vmatprep.subr.mxu0 0.0
        %673 = vmatpush1.msra.mxu0 0.0
        %674 = vmatprep.subr.mxu0 0.0
        %675 = vmatpush1.msra.mxu0 0.0
        %676 = vmatprep.subr.mxu0 0.0
        %677 = vmatpush1.msra.mxu0 0.0
        %678 = vmatprep.subr.mxu0 0.0
        %679 = vmatpush1.msra.mxu0 0.0
        %680 = vmatprep.subr.mxu0 0.0
        %681 = vmatpush1.msra.mxu0 0.0
        %682 = vmatprep.subr.mxu0 0.0
        %683 = vmatpush1.msra.mxu0 0.0
        %684 = vmatprep.subr.mxu0 0.0
        %685 = vmatpush1.msra.mxu0 0.0
        %686 = vmatprep.subr.mxu0 0.0
        %687 = vmatpush1.msra.mxu0 0.0
        %688 = vmatprep.subr.mxu0 0.0
        %689 = vmatpush1.msra.mxu0 0.0
        %690 = vmatprep.subr.mxu0 0.0
        %691 = vmatpush1.msra.mxu0 0.0
        %692 = vmatprep.subr.mxu0 0.0
        %693 = vmatpush1.msra.mxu0 0.0
        %694 = vmatprep.subr.mxu0 0.0
        %695 = vmatpush1.msra.mxu0 0.0
        %696 = vmatprep.subr.mxu0 0.0
        %697 = vmatpush1.msra.mxu0 0.0
        %698 = vmatprep.subr.mxu0 0.0
        %699 = vmatpush1.msra.mxu0 0.0
        %700 = vmatprep.subr.mxu0 0.0
        %701 = vmatpush1.msra.mxu0 0.0
        %702 = vmatprep.subr.mxu0 0.0
        %703 = vmatpush1.msra.mxu0 0.0
        %704 = vmatprep.subr.mxu0 0.0
        %705 = vmatpush1.msra.mxu0 0.0
        %706 = vmatprep.subr.mxu0 0.0
        %707 = vmatpush1.msra.mxu0 0.0
        %708 = vmatprep.subr.mxu0 0.0
        %709 = vmatpush1.msra.mxu0 0.0
        %710 = vmatprep.subr.mxu0 0.0
        %711 = vmatpush1.msra.mxu0 0.0
        %712 = vmatprep.subr.mxu0 0.0
        %713 = vmatpush1.msra.mxu0 0.0
        %714 = vmatprep.subr.mxu0 0.0
        %715 = vmatpush1.msra.mxu0 0.0
        %716 = vmatprep.subr.mxu0 0.0
        %717 = vmatpush1.msra.mxu0 0.0
        %718 = vmatprep.subr.mxu0 0.0
        %719 = vmatpush1.msra.mxu0 0.0
        %720 = vmatprep.subr.mxu0 0.0
        %721 = vmatpush1.msra.mxu0 0.0
        %722 = vmatprep.mubr.f32.mxu0 0.0
        %723 = vmatmul.mubr.f32.gmra.mrb[0].mxu0 %v656
        %v724 = vpop.f32.mrb[0].mxu0
        %v725 = vadd.f32 %v651, %v724
        %v726 = vpop.f32.mrb[0].mxu0
        %727 = vdwg.mxu0
        %v728 = vld [vmem:[%s562] sm:$0xff]
        %v729 = vld [vmem:[%s8] sm:$0x1]
        %731 = vset.pattern.permute.xlu0 0
        %732 = vperm.xlu0 %731, %v728
        %v733 = vpop.permute.xlu0 %732
        %v736 = vlaneseq
        %v737 = vshrl.u32 %v736, 7
        %v738 = vsub.s32 0, %v737
        %v739 = vrot.slane %v729, %v738
        %v741 = vmul.f32 %v733, %v739
        %v742 = vadd.f32 %v725, %v741
        %v743 = vld [vmem:[%s566] sm:$0xff]
        %v744 = vld [vmem:[%s9] sm:$0x1]
        %746 = vset.pattern.permute.xlu0 0
        %747 = vperm.xlu0 %746, %v743
        %v748 = vpop.permute.xlu0 %747
        %v751 = vlaneseq
        %v752 = vshrl.u32 %v751, 7
        %v753 = vsub.s32 0, %v752
        %v754 = vrot.slane %v744, %v753
        %v756 = vmul.f32 %v748, %v754
        %v757 = vadd.f32 %v742, %v756
        %v758 = vld [vmem:[%s570] sm:$0xff]
        %v759 = vld [vmem:[%s10] sm:$0x1f]
        %vm760 = vcmask 39936
        %v762 = vsel %vm760, %v758, 0
        %vm764 = vcmask 1044480
        %v766 = vsel %vm764, %v759, 0
        %768 = vmatprep.subr.mxu0 0.0
        %769 = vmatpush1.msra.mxu0 %v766
        %770 = vmatprep.subr.mxu0 0.0
        %771 = vmatpush1.msra.mxu0 0.0
        %772 = vmatprep.subr.mxu0 0.0
        %773 = vmatpush1.msra.mxu0 0.0
        %774 = vmatprep.subr.mxu0 0.0
        %775 = vmatpush1.msra.mxu0 0.0
        %776 = vmatprep.subr.mxu0 0.0
        %777 = vmatpush1.msra.mxu0 0.0
        %778 = vmatprep.subr.mxu0 0.0
        %779 = vmatpush1.msra.mxu0 0.0
        %780 = vmatprep.subr.mxu0 0.0
        %781 = vmatpush1.msra.mxu0 0.0
        %782 = vmatprep.subr.mxu0 0.0
        %783 = vmatpush1.msra.mxu0 0.0
        %784 = vmatprep.subr.mxu0 0.0
        %785 = vmatpush1.msra.mxu0 0.0
        %786 = vmatprep.subr.mxu0 0.0
        %787 = vmatpush1.msra.mxu0 0.0
        %788 = vmatprep.subr.mxu0 0.0
        %789 = vmatpush1.msra.mxu0 0.0
        %790 = vmatprep.subr.mxu0 0.0
        %791 = vmatpush1.msra.mxu0 0.0
        %792 = vmatprep.subr.mxu0 0.0
        %793 = vmatpush1.msra.mxu0 0.0
        %794 = vmatprep.subr.mxu0 0.0
        %795 = vmatpush1.msra.mxu0 0.0
        %796 = vmatprep.subr.mxu0 0.0
        %797 = vmatpush1.msra.mxu0 0.0
        %798 = vmatprep.subr.mxu0 0.0
        %799 = vmatpush1.msra.mxu0 0.0
        %800 = vmatprep.subr.mxu0 0.0
        %801 = vmatpush1.msra.mxu0 0.0
        %802 = vmatprep.subr.mxu0 0.0
        %803 = vmatpush1.msra.mxu0 0.0
        %804 = vmatprep.subr.mxu0 0.0
        %805 = vmatpush1.msra.mxu0 0.0
        %806 = vmatprep.subr.mxu0 0.0
        %807 = vmatpush1.msra.mxu0 0.0
        %808 = vmatprep.subr.mxu0 0.0
        %809 = vmatpush1.msra.mxu0 0.0
        %810 = vmatprep.subr.mxu0 0.0
        %811 = vmatpush1.msra.mxu0 0.0
        %812 = vmatprep.subr.mxu0 0.0
        %813 = vmatpush1.msra.mxu0 0.0
        %814 = vmatprep.subr.mxu0 0.0
        %815 = vmatpush1.msra.mxu0 0.0
        %816 = vmatprep.subr.mxu0 0.0
        %817 = vmatpush1.msra.mxu0 0.0
        %818 = vmatprep.subr.mxu0 0.0
        %819 = vmatpush1.msra.mxu0 0.0
        %820 = vmatprep.subr.mxu0 0.0
        %821 = vmatpush1.msra.mxu0 0.0
        %822 = vmatprep.subr.mxu0 0.0
        %823 = vmatpush1.msra.mxu0 0.0
        %824 = vmatprep.subr.mxu0 0.0
        %825 = vmatpush1.msra.mxu0 0.0
        %826 = vmatprep.subr.mxu0 0.0
        %827 = vmatpush1.msra.mxu0 0.0
        %828 = vmatprep.subr.mxu0 0.0
        %829 = vmatpush1.msra.mxu0 0.0
        %830 = vmatprep.subr.mxu0 0.0
        %831 = vmatpush1.msra.mxu0 0.0
        %832 = vmatprep.mubr.f32.mxu0 0.0
        %833 = vmatmul.mubr.f32.gmra.mrb[0].mxu0 %v762
        %v834 = vpop.f32.mrb[0].mxu0
        %v835 = vadd.f32 0.0, %v834
        %v836 = vpop.f32.mrb[0].mxu0
        %837 = vdwg.mxu0
        %v838 = vadd.f32 %v757, %v835
        %v839 = vld [vmem:[%s574] sm:$0xff]
        %v840 = vld [vmem:[%s11] sm:$0x1]
        %842 = vset.pattern.permute.xlu0 0
        %843 = vperm.xlu0 %842, %v839
        %v844 = vpop.permute.xlu0 %843
        %v847 = vlaneseq
        %v848 = vshrl.u32 %v847, 7
        %v849 = vsub.s32 0, %v848
        %v850 = vrot.slane %v840, %v849
        %v852 = vmul.f32 %v844, %v850
        %v853 = vadd.f32 %v838, %v852
        %v854 = vld [vmem:[%s12] sm:$0x1]
        %v856 = vlaneseq
        %v857 = vshrl.u32 %v856, 7
        %v858 = vsub.s32 0, %v857
        %v859 = vrot.slane %v854, %v858
        %v861 = vadd.f32 %v853, %v859
        %v862 = vmax.f32 %v861, 0.0
        %v863 = vld [vmem:[%s13] sm:$0xff]
        %v864 = vld [vmem:[%s13 + $0x8] sm:$0xff]
        %v865 = vld [vmem:[%s13 + $0x10] sm:$0xff]
        %v866 = vld [vmem:[%s13 + $0x18] sm:$0xff]
        %v867 = vld [vmem:[%s13 + $0x20] sm:$0xff]
        %v868 = vld [vmem:[%s13 + $0x28] sm:$0xff]
        %v869 = vld [vmem:[%s13 + $0x30] sm:$0xff]
        %v870 = vld [vmem:[%s13 + $0x38] sm:$0xff]
        %v871 = vld [vmem:[%s13 + $0x40] sm:$0xff]
        %v872 = vld [vmem:[%s13 + $0x48] sm:$0xff]
        %v873 = vld [vmem:[%s13 + $0x50] sm:$0xff]
        %v874 = vld [vmem:[%s13 + $0x58] sm:$0xff]
        %v875 = vld [vmem:[%s13 + $0x60] sm:$0xff]
        %v876 = vld [vmem:[%s13 + $0x68] sm:$0xff]
        %v877 = vld [vmem:[%s13 + $0x70] sm:$0xff]
        %v878 = vld [vmem:[%s13 + $0x78] sm:$0xff]
        %v879 = vld [vmem:[%s14] sm:$0x1]
        %v881 = vlaneseq
        %v882 = vshrl.u32 %v881, 7
        %v883 = vsub.s32 0, %v882
        %v884 = vrot.slane %v879, %v883
        %886 = vmatprep.subr.mxu0 0.0
        %887 = vmatpush1.msra.mxu0 %v863
        %888 = vmatprep.subr.mxu0 0.0
        %889 = vmatpush1.msra.mxu0 %v864
        %890 = vmatprep.subr.mxu0 0.0
        %891 = vmatpush1.msra.mxu0 %v865
        %892 = vmatprep.subr.mxu0 0.0
        %893 = vmatpush1.msra.mxu0 %v866
        %894 = vmatprep.subr.mxu0 0.0
        %895 = vmatpush1.msra.mxu0 %v867
        %896 = vmatprep.subr.mxu0 0.0
        %897 = vmatpush1.msra.mxu0 %v868
        %898 = vmatprep.subr.mxu0 0.0
        %899 = vmatpush1.msra.mxu0 %v869
        %900 = vmatprep.subr.mxu0 0.0
        %901 = vmatpush1.msra.mxu0 %v870
        %902 = vmatprep.subr.mxu0 0.0
        %903 = vmatpush1.msra.mxu0 %v871
        %904 = vmatprep.subr.mxu0 0.0
        %905 = vmatpush1.msra.mxu0 %v872
        %906 = vmatprep.subr.mxu0 0.0
        %907 = vmatpush1.msra.mxu0 %v873
        %908 = vmatprep.subr.mxu0 0.0
        %909 = vmatpush1.msra.mxu0 %v874
        %910 = vmatprep.subr.mxu0 0.0
        %911 = vmatpush1.msra.mxu0 %v875
        %912 = vmatprep.subr.mxu0 0.0
        %913 = vmatpush1.msra.mxu0 %v876
        %914 = vmatprep.subr.mxu0 0.0
        %915 = vmatpush1.msra.mxu0 %v877
        %916 = vmatprep.subr.mxu0 0.0
        %917 = vmatpush1.msra.mxu0 %v878
        %918 = vmatprep.subr.mxu0 0.0
        %919 = vmatpush1.msra.mxu0 0.0
        %920 = vmatprep.subr.mxu0 0.0
        %921 = vmatpush1.msra.mxu0 0.0
        %922 = vmatprep.subr.mxu0 0.0
        %923 = vmatpush1.msra.mxu0 0.0
        %924 = vmatprep.subr.mxu0 0.0
        %925 = vmatpush1.msra.mxu0 0.0
        %926 = vmatprep.subr.mxu0 0.0
        %927 = vmatpush1.msra.mxu0 0.0
        %928 = vmatprep.subr.mxu0 0.0
        %929 = vmatpush1.msra.mxu0 0.0
        %930 = vmatprep.subr.mxu0 0.0
        %931 = vmatpush1.msra.mxu0 0.0
        %932 = vmatprep.subr.mxu0 0.0
        %933 = vmatpush1.msra.mxu0 0.0
        %934 = vmatprep.subr.mxu0 0.0
        %935 = vmatpush1.msra.mxu0 0.0
        %936 = vmatprep.subr.mxu0 0.0
        %937 = vmatpush1.msra.mxu0 0.0
        %938 = vmatprep.subr.mxu0 0.0
        %939 = vmatpush1.msra.mxu0 0.0
        %940 = vmatprep.subr.mxu0 0.0
        %941 = vmatpush1.msra.mxu0 0.0
        %942 = vmatprep.subr.mxu0 0.0
        %943 = vmatpush1.msra.mxu0 0.0
        %944 = vmatprep.subr.mxu0 0.0
        %945 = vmatpush1.msra.mxu0 0.0
        %946 = vmatprep.subr.mxu0 0.0
        %947 = vmatpush1.msra.mxu0 0.0
        %948 = vmatprep.subr.mxu0 0.0
        %949 = vmatpush1.msra.mxu0 0.0
        %950 = vmatprep.mubr.f32.mxu0 0.0
        %951 = vmatmul.mubr.f32.gmra.mrb[0].mxu0 %v862
        %v952 = vpop.f32.mrb[0].mxu0
        %v953 = vadd.f32 %v884, %v952
        %v954 = vpop.f32.mrb[0].mxu0
        %955 = vdwg.mxu0
        %v956 = vmax.f32 %v953, 0.0
        %vm957 = vcmask 261120
        %958 = vst.msk [vmem:[%s550] sm:$0xff] %vm957, %v956
        %s959 = sand.u32 %s382, 1
        %s960 = scalar_lea.sflag [#allocation3], %s959
        %s961 = sand.u32 %s382, 1
        %s962 = smul.addr %s961, 8
        %s963 = scalar_lea.vmem [#allocation2], %s962
        // Predicated region
        $region81: #{tpu_custom_call.1} parent=79 // pred_check
          %p964 = pneg %p392
        $region82: #{tpu_custom_call.1} parent=79 // pred_check_branch
          %966 = sbr.rel (%p964) target = $region84
        $region83: #{tpu_custom_call.1} parent=79 // pred_region
          %s968 = ssub.s32 128, 128
          %969 = vsyncadd %s960, %s968
          %s970 = smul.addr %s29, 128
          %s971 = scalar_lea.hbm %s15, %s970
          %s973 = sshll.u32 %s963, 4
          %s974 = int_to_ptr.vmem [resolvable:$true] %s973
          %976 = dma.vmem_to_hbm [thread:$0]  %s974, 128, %s971, %s960
        $region84: #{tpu_custom_call.1} parent=79 // pred_fallthru
          _
      $region80: #{tpu_custom_call.1} parent=5 // pred_fallthru
        _
      %p977 = scmp.le.s32.totalorder 2, %s24
      // Predicated region
      $region85: #{tpu_custom_call.1} parent=5 // pred_check
        %p978 = pneg %p977
      $region86: #{tpu_custom_call.1} parent=5 // pred_check_branch
        %980 = sbr.rel (%p978) target = $region88
      $region87: #{tpu_custom_call.1} parent=5 // pred_region
        %s981 = ssub.s32 %s24, 2
        // Predicated region
        $region89: #{tpu_custom_call.1} parent=87 // pred_check
          %p982 = pneg %p398
        $region90: #{tpu_custom_call.1} parent=87 // pred_check_branch
          %984 = sbr.rel (%p982) target = $region92
        $region91: #{tpu_custom_call.1} parent=87 // pred_region
          %s985 = sand.u32 %s383, 1
          %s986 = scalar_lea.sflag [#allocation3], %s985
          %s987 = sand.u32 %s383, 1
          %s988 = smul.addr %s987, 8
          %s989 = scalar_lea.vmem [#allocation2], %s988
          %990 = dma.done %s986, 128
        $region92: #{tpu_custom_call.1} parent=87 // pred_fallthru
          _
      $region88: #{tpu_custom_call.1} parent=5 // pred_fallthru
        _
    $region6: #{tpu_custom_call.1} parent=1 // loop_footer
      %s28 = sadd.s32 1, %s24
    $region7: #{tpu_custom_call.1} parent=1 // loop_footer_branch
      %23 = sbr.rel target = $region3
    $region8: #{tpu_custom_call.1} parent=1 // loop_exit
      _
    %991 = vsyncpa [#allocation3], 1
    %s992 = scalar_lea.sflag [#allocation3], 1
    %993 = vsyncpa %s992, 1

</llo_original>
